<compile_context>
chip_gen: v7x
topology: tpu7x:2x2x1
jax: 0.10.0
libtpu: 0.0.40
codegen_flags: <defaults>
</compile_context>

<pallas_src>
import functools

import jax
import jax.numpy as jnp
from jax.experimental import pallas as pl
from jax.experimental.pallas import tpu as pltpu


LANE = 128


def _round_up(x, m):
    return (x + m - 1) // m * m


def actor_kernel(x_ref, w1_ref, b1_ref, w2_ref, b2_ref, w3_ref, b3_ref,
                 o_ref, *, max_action):
    """One batch tile: x (TB, S_pad) f32, weights bf16 (VMEM-resident), out f32."""
    mxu_dtype = w1_ref.dtype

    # Layer 1: Linear + ReLU   (bf16 MXU inputs, f32 accumulate / elementwise)
    x = x_ref[...].astype(mxu_dtype)
    h1 = jnp.dot(x, w1_ref[...], preferred_element_type=jnp.float32)
    h1 = jnp.maximum(h1 + b1_ref[...], 0.0)

    # Layer 2: Linear + ReLU
    h2 = jnp.dot(h1.astype(mxu_dtype), w2_ref[...],
                 preferred_element_type=jnp.float32)
    h2 = jnp.maximum(h2 + b2_ref[...], 0.0)

    # Layer 3: Linear + Tanh, scale by max_action
    h3 = jnp.dot(h2.astype(mxu_dtype), w3_ref[...],
                 preferred_element_type=jnp.float32)
    o_ref[...] = (jnp.tanh(h3 + b3_ref[...]) * max_action).astype(o_ref.dtype)


def actor_forward(x, params, max_action, *, block_b=512,
                  mxu_dtype=jnp.bfloat16):
    """x: (B, state_dim) float32.  Returns (B, action_dim) float32."""
    w1, b1, w2, b2, w3, b3 = params
    B, S = x.shape
    H = w1.shape[1]
    A = w3.shape[1]

    # --- wrapper-side layout plumbing (zero padding, no math change) ---------
    S_pad = _round_up(max(S, LANE), LANE)      # lane-pad input features
    A_pad = _round_up(max(A, LANE), LANE)      # lane-pad output features

    # Batch tile: big enough to pipeline / feed the MXU, capped for small B.
    TB = min(block_b, _round_up(B, 8))
    B_pad = _round_up(B, TB)

    x_p = jnp.zeros((B_pad, S_pad), jnp.float32).at[:B, :S].set(x)
    w1_p = jnp.zeros((S_pad, H), mxu_dtype).at[:S, :].set(w1.astype(mxu_dtype))
    w2_p = w2.astype(mxu_dtype)
    w3_p = jnp.zeros((H, A_pad), mxu_dtype).at[:, :A].set(w3.astype(mxu_dtype))
    b1_p = b1.reshape(1, H).astype(jnp.float32)
    b2_p = b2.reshape(1, H).astype(jnp.float32)
    b3_p = jnp.zeros((1, A_pad), jnp.float32).at[:, :A].set(b3.reshape(1, A))

    kernel = functools.partial(actor_kernel, max_action=float(max_action))

    grid = (B_pad // TB,)
    out = pl.pallas_call(
        kernel,
        out_shape=jax.ShapeDtypeStruct((B_pad, A_pad), jnp.float32),
        grid_spec=pltpu.PrefetchScalarGridSpec(
            num_scalar_prefetch=0,
            grid=grid,
            in_specs=[
                # x: tiled over batch (double-buffered by the pipeline)
                pl.BlockSpec((TB, S_pad), lambda i: (i, 0)),
                # weights / biases: same block every step -> VMEM-resident
                pl.BlockSpec((S_pad, H), lambda i: (0, 0)),
                pl.BlockSpec((1, H), lambda i: (0, 0)),
                pl.BlockSpec((H, H), lambda i: (0, 0)),
                pl.BlockSpec((1, H), lambda i: (0, 0)),
                pl.BlockSpec((H, A_pad), lambda i: (0, 0)),
                pl.BlockSpec((1, A_pad), lambda i: (0, 0)),
            ],
            out_specs=pl.BlockSpec((TB, A_pad), lambda i: (i, 0)),
        ),
        compiler_params=pltpu.CompilerParams(
            dimension_semantics=("parallel",),        # shard batch over TCs (v7x)
            vmem_limit_bytes=48 * 1024 * 1024,        # explicit; safe on 64 MiB v7x
        ),
    )(x_p, w1_p, b1_p, w2_p, b2_p, w3_p, b3_p)

    return out[:B, :A]


def actor_reference(x, params, max_action, mxu_dtype=jnp.bfloat16):
    """Plain-JAX reference with the same bf16-in / f32-accumulate math."""
    w1, b1, w2, b2, w3, b3 = params
    h = jnp.dot(x.astype(mxu_dtype), w1.astype(mxu_dtype),
                preferred_element_type=jnp.float32) + b1.reshape(1, -1)
    h = jnp.maximum(h, 0.0)
    h = jnp.dot(h.astype(mxu_dtype), w2.astype(mxu_dtype),
                preferred_element_type=jnp.float32) + b2.reshape(1, -1)
    h = jnp.maximum(h, 0.0)
    h = jnp.dot(h.astype(mxu_dtype), w3.astype(mxu_dtype),
                preferred_element_type=jnp.float32) + b3.reshape(1, -1)
    return jnp.tanh(h) * max_action


def actor_reference_f32(x, params, max_action):
    """Pure-f32 reference (exact PyTorch semantics)."""
    w1, b1, w2, b2, w3, b3 = params
    h = jnp.maximum(x @ w1 + b1.reshape(1, -1), 0.0)
    h = jnp.maximum(h @ w2 + b2.reshape(1, -1), 0.0)
    return jnp.tanh(h @ w3 + b3.reshape(1, -1)) * max_action


def init_actor_params(key, state_dim, action_dim, hidden=256):
    """Deterministic PyTorch-style (Kaiming-uniform) init for each nn.Linear."""
    keys = jax.random.split(key, 6)

    def linear(kw, kb, fan_in, fan_out):
        bound = 1.0 / jnp.sqrt(float(fan_in))
        w = jax.random.uniform(kw, (fan_in, fan_out), jnp.float32, -bound, bound)
        b = jax.random.uniform(kb, (1, fan_out), jnp.float32, -bound, bound)
        return w, b

    w1, b1 = linear(keys[0], keys[1], state_dim, hidden)
    w2, b2 = linear(keys[2], keys[3], hidden, hidden)
    w3, b3 = linear(keys[4], keys[5], hidden, action_dim)
    return (w1, b1, w2, b2, w3, b3)


if __name__ == "__main__":
    key = jax.random.PRNGKey(0)
    k_params, k_x = jax.random.split(key)

    batch = 20          # deliberately not a multiple of the tile -> tests padding
    state_dim = 16
    action_dim = 8
    max_action = 2.0

    params = init_actor_params(k_params, state_dim, action_dim)
    x = jax.random.normal(k_x, (batch, state_dim), dtype=jnp.float32)

    # block_b=8 -> 3 grid steps on this tiny demo, exercising the batch pipeline.
    out = actor_forward(x, params, max_action, block_b=8)
    jax.block_until_ready(out)
    assert out.shape == (batch, action_dim)

    # Tight check against the bf16-matmul / f32-accumulate reference.
    ref_bf16 = actor_reference(x, params, max_action)
    assert jnp.allclose(out, ref_bf16, atol=1e-3, rtol=1e-3), \
        float(jnp.max(jnp.abs(out - ref_bf16)))

    # Loose check against the exact f32 PyTorch semantics (bf16 MXU inputs).
    ref_f32 = actor_reference_f32(x, params, max_action)
    assert jnp.allclose(out, ref_f32, atol=5e-2, rtol=5e-2), \
        float(jnp.max(jnp.abs(out - ref_f32)))

    print("KERNEL_OK")
</pallas_src>

<mosaic_0001>
module attributes {stable_mosaic.version = 11 : i64} {
  func.func @actor_kernel(%arg0: i32, %arg1: memref<8x128xf32, #tpu.memory_space<vmem>>, %arg2: memref<128x256xbf16, #tpu.memory_space<vmem>>, %arg3: memref<1x256xf32, #tpu.memory_space<vmem>>, %arg4: memref<256x256xbf16, #tpu.memory_space<vmem>>, %arg5: memref<1x256xf32, #tpu.memory_space<vmem>>, %arg6: memref<256x128xbf16, #tpu.memory_space<vmem>>, %arg7: memref<1x128xf32, #tpu.memory_space<vmem>>, %arg8: memref<8x128xf32, #tpu.memory_space<vmem>>) attributes {dimension_semantics = [#tpu.dimension_semantics<parallel>], iteration_bounds = array<i64: 3>, scalar_prefetch = 0 : i64, scratch_operands = 0 : i64, tpu.core_type = #tpu.core_type<tc>, window_params = [{transform_indices = @transform_0, window_bounds = array<i64: 8, 128>}, {pipeline_mode = #tpu.pipeline_mode<synchronous>, transform_indices = @transform_1, window_bounds = array<i64: 128, 256>}, {pipeline_mode = #tpu.pipeline_mode<synchronous>, transform_indices = @transform_2, window_bounds = array<i64: 1, 256>}, {pipeline_mode = #tpu.pipeline_mode<synchronous>, transform_indices = @transform_3, window_bounds = array<i64: 256, 256>}, {pipeline_mode = #tpu.pipeline_mode<synchronous>, transform_indices = @transform_4, window_bounds = array<i64: 1, 256>}, {pipeline_mode = #tpu.pipeline_mode<synchronous>, transform_indices = @transform_5, window_bounds = array<i64: 256, 128>}, {pipeline_mode = #tpu.pipeline_mode<synchronous>, transform_indices = @transform_6, window_bounds = array<i64: 1, 128>}, {transform_indices = @transform_7, window_bounds = array<i64: 8, 128>}]} {
    %c0 = arith.constant 0 : index
    %c0_0 = arith.constant 0 : index
    %0 = vector.load %arg1[%c0, %c0_0] : memref<8x128xf32, #tpu.memory_space<vmem>>, vector<8x128xf32>
    %1 = arith.truncf %0 : vector<8x128xf32> to vector<8x128xbf16>
    %c0_1 = arith.constant 0 : index
    %c0_2 = arith.constant 0 : index
    %2 = vector.load %arg2[%c0_1, %c0_2] : memref<128x256xbf16, #tpu.memory_space<vmem>>, vector<128x256xbf16>
    %cst = arith.constant dense<0.000000e+00> : vector<8x256xf32>
    %3 = tpu.matmul %1, %2, %cst {dimension_numbers = #tpu.dot_dimension_numbers<[1], [0], [0], [1], [0, 0, 1, 1], [], []>} : vector<8x128xbf16>, vector<128x256xbf16>, vector<8x256xf32> -> vector<8x256xf32>
    %c0_3 = arith.constant 0 : index
    %c0_4 = arith.constant 0 : index
    %4 = vector.load %arg3[%c0_3, %c0_4] : memref<1x256xf32, #tpu.memory_space<vmem>>, vector<1x256xf32>
    %5 = vector.broadcast %4 : vector<1x256xf32> to vector<8x256xf32>
    %6 = arith.addf %3, %5 : vector<8x256xf32>
    %cst_5 = arith.constant 0.000000e+00 : f32
    %7 = vector.broadcast %cst_5 : f32 to vector<8x256xf32>
    %8 = arith.maximumf %6, %7 : vector<8x256xf32>
    %9 = arith.truncf %8 : vector<8x256xf32> to vector<8x256xbf16>
    %c0_6 = arith.constant 0 : index
    %c0_7 = arith.constant 0 : index
    %10 = vector.load %arg4[%c0_6, %c0_7] : memref<256x256xbf16, #tpu.memory_space<vmem>>, vector<256x256xbf16>
    %cst_8 = arith.constant dense<0.000000e+00> : vector<8x256xf32>
    %11 = tpu.matmul %9, %10, %cst_8 {dimension_numbers = #tpu.dot_dimension_numbers<[1], [0], [0], [1], [0, 0, 1, 1], [], []>} : vector<8x256xbf16>, vector<256x256xbf16>, vector<8x256xf32> -> vector<8x256xf32>
    %c0_9 = arith.constant 0 : index
    %c0_10 = arith.constant 0 : index
    %12 = vector.load %arg5[%c0_9, %c0_10] : memref<1x256xf32, #tpu.memory_space<vmem>>, vector<1x256xf32>
    %13 = vector.broadcast %12 : vector<1x256xf32> to vector<8x256xf32>
    %14 = arith.addf %11, %13 : vector<8x256xf32>
    %cst_11 = arith.constant 0.000000e+00 : f32
    %15 = vector.broadcast %cst_11 : f32 to vector<8x256xf32>
    %16 = arith.maximumf %14, %15 : vector<8x256xf32>
    %17 = arith.truncf %16 : vector<8x256xf32> to vector<8x256xbf16>
    %c0_12 = arith.constant 0 : index
    %c0_13 = arith.constant 0 : index
    %18 = vector.load %arg6[%c0_12, %c0_13] : memref<256x128xbf16, #tpu.memory_space<vmem>>, vector<256x128xbf16>
    %cst_14 = arith.constant dense<0.000000e+00> : vector<8x128xf32>
    %19 = tpu.matmul %17, %18, %cst_14 {dimension_numbers = #tpu.dot_dimension_numbers<[1], [0], [0], [1], [0, 0, 1, 1], [], []>} : vector<8x256xbf16>, vector<256x128xbf16>, vector<8x128xf32> -> vector<8x128xf32>
    %c0_15 = arith.constant 0 : index
    %c0_16 = arith.constant 0 : index
    %20 = vector.load %arg7[%c0_15, %c0_16] : memref<1x128xf32, #tpu.memory_space<vmem>>, vector<1x128xf32>
    %21 = vector.broadcast %20 : vector<1x128xf32> to vector<8x128xf32>
    %22 = arith.addf %19, %21 : vector<8x128xf32>
    %23 = math.tanh %22 : vector<8x128xf32>
    %cst_17 = arith.constant 2.000000e+00 : f32
    %24 = vector.broadcast %cst_17 : f32 to vector<8x128xf32>
    %25 = arith.mulf %23, %24 : vector<8x128xf32>
    %c0_18 = arith.constant 0 : index
    %c0_19 = arith.constant 0 : index
    %26 = vector.load %arg8[%c0_18, %c0_19] : memref<8x128xf32, #tpu.memory_space<vmem>>, vector<8x128xf32>
    tpu.vector_store %arg8[%c0_18, %c0_19], %25 {strides = array<i32>} : memref<8x128xf32, #tpu.memory_space<vmem>>, vector<8x128xf32>,
    return
  }
  func.func @transform_0(%arg0: i32) -> (i32, i32) {
    %c0_i32 = arith.constant 0 : i32
    %c0_i32_0 = arith.constant 0 : i32
    return %arg0, %c0_i32 : i32, i32
  }
  func.func @transform_1(%arg0: i32) -> (i32, i32) {
    %c0_i32 = arith.constant 0 : i32
    %c0_i32_0 = arith.constant 0 : i32
    %c0_i32_1 = arith.constant 0 : i32
    return %c0_i32, %c0_i32_0 : i32, i32
  }
  func.func @transform_2(%arg0: i32) -> (i32, i32) {
    %c0_i32 = arith.constant 0 : i32
    %c0_i32_0 = arith.constant 0 : i32
    %c0_i32_1 = arith.constant 0 : i32
    return %c0_i32, %c0_i32_0 : i32, i32
  }
  func.func @transform_3(%arg0: i32) -> (i32, i32) {
    %c0_i32 = arith.constant 0 : i32
    %c0_i32_0 = arith.constant 0 : i32
    %c0_i32_1 = arith.constant 0 : i32
    return %c0_i32, %c0_i32_0 : i32, i32
  }
  func.func @transform_4(%arg0: i32) -> (i32, i32) {
    %c0_i32 = arith.constant 0 : i32
    %c0_i32_0 = arith.constant 0 : i32
    %c0_i32_1 = arith.constant 0 : i32
    return %c0_i32, %c0_i32_0 : i32, i32
  }
  func.func @transform_5(%arg0: i32) -> (i32, i32) {
    %c0_i32 = arith.constant 0 : i32
    %c0_i32_0 = arith.constant 0 : i32
    %c0_i32_1 = arith.constant 0 : i32
    return %c0_i32, %c0_i32_0 : i32, i32
  }
  func.func @transform_6(%arg0: i32) -> (i32, i32) {
    %c0_i32 = arith.constant 0 : i32
    %c0_i32_0 = arith.constant 0 : i32
    %c0_i32_1 = arith.constant 0 : i32
    return %c0_i32, %c0_i32_0 : i32, i32
  }
  func.func @transform_7(%arg0: i32) -> (i32, i32) {
    %c0_i32 = arith.constant 0 : i32
    %c0_i32_0 = arith.constant 0 : i32
    return %arg0, %c0_i32 : i32, i32
  }
}

</mosaic_0001>

<llo_original>
// kernel: tpu_custom_call.1
$region0: #{tpu_custom_call.1}
  #allocation0 [shape = 'u32[]', space=smem, size = 0x4, offset = 0x4, fixed_abs, tag = 'smem constant byte address 0x4 - core index']
  #allocation1 [shape = 'u32[144,128]{1,0:T(1,128)}', space=vmem, size = 0x12000, scoped, tag = 'internal scratch']
  %s0 = inlined_call_operand.hbm [shape: f32[24,128], index: 0, kind: input, shape index: {}]
  %s1 = inlined_call_operand.hbm [shape: bf16[128,256], index: 1, kind: input, shape index: {}]
  %s2 = inlined_call_operand.vmem [shape: f32[1,256], index: 2, kind: input, shape index: {}]
  %s3 = inlined_call_operand.hbm [shape: bf16[256,256], index: 3, kind: input, shape index: {}]
  %s4 = inlined_call_operand.vmem [shape: f32[1,256], index: 4, kind: input, shape index: {}]
  %s5 = inlined_call_operand.hbm [shape: bf16[256,128], index: 5, kind: input, shape index: {}]
  %s6 = inlined_call_operand.vmem [shape: f32[1,128], index: 6, kind: input, shape index: {}]
  %s7 = inlined_call_operand.hbm [shape: f32[24,128], index: 7, kind: output, shape index: {}]
  %s8 = sld [smem:[#allocation0]]
  $region77: #{tpu_custom_call.1} parent=0
    _
  %s10 = ssub.s32 1, %s8
  %s11 = scalar_select 0, %s10, %s8
  $region1: #{tpu_custom_call.1} parent=0
    #allocation2 [shape = 'u8[8192]{0}', space=vmem, size = 0x2000, scoped, tag = 'input window, operand 0']
    #allocation3 [shape = 's32[2]{0}', space=sflag, size = 0x8, scoped, tag = 'scoped memory for tpu_custom_call.1']
    #allocation4 [shape = 's32[2]{0}', space=sflag, size = 0x8, scoped, tag = 'scoped memory for tpu_custom_call.1']
    #allocation5 [shape = 'u8[65536]{0}', space=vmem, size = 0x10000, scoped, tag = 'input window, operand 1, single buffered']
    #allocation6 [shape = 's32[1]{0}', space=sflag, size = 0x4, scoped, tag = 'scoped memory for tpu_custom_call.1']
    #allocation7 [shape = 'u8[131072]{0}', space=vmem, size = 0x20000, scoped, tag = 'input window, operand 3, single buffered']
    #allocation8 [shape = 'u8[65536]{0}', space=vmem, size = 0x10000, scoped, tag = 'input window, operand 5, single buffered']
    #allocation9 [shape = 's32[1]{0}', space=sflag, size = 0x4, scoped, tag = 'scoped memory for tpu_custom_call.1']
    #allocation10 [shape = 'u8[8192]{0}', space=vmem, size = 0x2000, scoped, tag = 'output window, operand 0']
    %12 = vsyncpa [#allocation3], 0
    %s13 = scalar_lea.sflag [#allocation3], 1
    %14 = vsyncpa %s13, 0
    %15 = vsyncpa [#allocation6], 0
    %16 = vsyncpa [#allocation9], 0
    %17 = vsyncpa [#allocation4], 0
    %s18 = scalar_lea.sflag [#allocation4], 1
    %19 = vsyncpa %s18, 0
    loop: start=0, step=1, limit=5
    $region2: #{tpu_custom_call.1} parent=1 // loop_pre_header
      _
    $region3: #{tpu_custom_call.1} parent=1 // loop_header
      %s21 = sphi 0, %s25
      %p22 = scmp.ge.s32.totalorder %s21, 5
      %s31 = sphi 0, %s33
      %s34 = sphi 0, %s31
      %s35 = sphi 0, %s34
      %s51 = sphi 0, %s35
      %s55 = sphi 0, %s55
      %s57 = sphi 0, %s55
      %s58 = sphi 0, %s57
      %s72 = sphi 0, %s58
      %s76 = sphi 0, %s76
      %s78 = sphi 0, %s76
      %s79 = sphi 0, %s78
      %s93 = sphi 0, %s79
      %s97 = sphi 0, %s97
      %s99 = sphi 0, %s97
      %s100 = sphi 0, %s99
      %s114 = sphi 0, %s100
      %s118 = sphi 0, %s118
      %s120 = sphi 0, %s118
      %s121 = sphi 0, %s120
      %s135 = sphi 0, %s121
      %s139 = sphi 0, %s139
      %s141 = sphi 0, %s139
      %s142 = sphi 0, %s141
      %s156 = sphi 0, %s142
      %s160 = sphi 0, %s160
      %s162 = sphi 0, %s160
      %s163 = sphi 0, %s162
      %s177 = sphi 0, %s163
      %s183 = sphi 0, %s185
      %s186 = sphi 0, %s183
      %s187 = sphi 0, %s186
      %s203 = sphi 0, %s187
    $region4: #{tpu_custom_call.1} parent=1 // loop_header_branch
      %24 = sbr.rel (%p22) target = $region8
    $region5: #{tpu_custom_call.1} parent=1 // loop_body
      %s26 = ssub.s32 %s21, 1
      %s27 = ssub.s32 %s21, 2
      %s28 = sadd.s32 %s21, 1
      %s29 = ssub.s32 %s21, %s28
      %p30 = scmp.eq.s32.totalorder %s29, 0
      %s32 = sadd.s32 %s31, 1
      %s33 = scalar_select %p30, %s31, %s32
      %p36 = pneg %p30
      %p37 = scmp.eq.s32.totalorder %s21, 2
      %p38 = por %p36, %p37
      %p39 = scmp.ne.s32.totalorder %s31, %s34
      %p40 = scmp.eq.s32.totalorder %s21, 0
      %p41 = por %p39, %p40
      %p42 = scmp.ne.s32.totalorder %s31, %s34
      %p43 = scmp.eq.s32.totalorder %s26, 2
      %p44 = por %p42, %p43
      %p45 = scmp.ne.s32.totalorder %s34, %s35
      %p46 = scmp.eq.s32.totalorder %s26, 0
      %p47 = por %p45, %p46
      %p48 = scmp.ne.s32.totalorder %s34, %s35
      %p49 = scmp.eq.s32.totalorder %s27, 2
      %p50 = por %p48, %p49
      %p52 = scmp.ne.s32.totalorder %s35, %s51
      %p53 = scmp.eq.s32.totalorder %s27, 0
      %p54 = por %p52, %p53
      %s56 = sadd.s32 %s55, 1
      %p59 = scmp.eq.s32.totalorder %s21, 2
      %p60 = scmp.ne.s32.totalorder %s55, %s57
      %p61 = scmp.eq.s32.totalorder %s21, 0
      %p62 = por %p60, %p61
      %p63 = scmp.ne.s32.totalorder %s55, %s57
      %p64 = scmp.eq.s32.totalorder %s26, 2
      %p65 = por %p63, %p64
      %p66 = scmp.ne.s32.totalorder %s57, %s58
      %p67 = scmp.eq.s32.totalorder %s26, 0
      %p68 = por %p66, %p67
      %p69 = scmp.ne.s32.totalorder %s57, %s58
      %p70 = scmp.eq.s32.totalorder %s27, 2
      %p71 = por %p69, %p70
      %p73 = scmp.ne.s32.totalorder %s58, %s72
      %p74 = scmp.eq.s32.totalorder %s27, 0
      %p75 = por %p73, %p74
      %s77 = sadd.s32 %s76, 1
      %p80 = scmp.eq.s32.totalorder %s21, 2
      %p81 = scmp.ne.s32.totalorder %s76, %s78
      %p82 = scmp.eq.s32.totalorder %s21, 0
      %p83 = por %p81, %p82
      %p84 = scmp.ne.s32.totalorder %s76, %s78
      %p85 = scmp.eq.s32.totalorder %s26, 2
      %p86 = por %p84, %p85
      %p87 = scmp.ne.s32.totalorder %s78, %s79
      %p88 = scmp.eq.s32.totalorder %s26, 0
      %p89 = por %p87, %p88
      %p90 = scmp.ne.s32.totalorder %s78, %s79
      %p91 = scmp.eq.s32.totalorder %s27, 2
      %p92 = por %p90, %p91
      %p94 = scmp.ne.s32.totalorder %s79, %s93
      %p95 = scmp.eq.s32.totalorder %s27, 0
      %p96 = por %p94, %p95
      %s98 = sadd.s32 %s97, 1
      %p101 = scmp.eq.s32.totalorder %s21, 2
      %p102 = scmp.ne.s32.totalorder %s97, %s99
      %p103 = scmp.eq.s32.totalorder %s21, 0
      %p104 = por %p102, %p103
      %p105 = scmp.ne.s32.totalorder %s97, %s99
      %p106 = scmp.eq.s32.totalorder %s26, 2
      %p107 = por %p105, %p106
      %p108 = scmp.ne.s32.totalorder %s99, %s100
      %p109 = scmp.eq.s32.totalorder %s26, 0
      %p110 = por %p108, %p109
      %p111 = scmp.ne.s32.totalorder %s99, %s100
      %p112 = scmp.eq.s32.totalorder %s27, 2
      %p113 = por %p111, %p112
      %p115 = scmp.ne.s32.totalorder %s100, %s114
      %p116 = scmp.eq.s32.totalorder %s27, 0
      %p117 = por %p115, %p116
      %s119 = sadd.s32 %s118, 1
      %p122 = scmp.eq.s32.totalorder %s21, 2
      %p123 = scmp.ne.s32.totalorder %s118, %s120
      %p124 = scmp.eq.s32.totalorder %s21, 0
      %p125 = por %p123, %p124
      %p126 = scmp.ne.s32.totalorder %s118, %s120
      %p127 = scmp.eq.s32.totalorder %s26, 2
      %p128 = por %p126, %p127
      %p129 = scmp.ne.s32.totalorder %s120, %s121
      %p130 = scmp.eq.s32.totalorder %s26, 0
      %p131 = por %p129, %p130
      %p132 = scmp.ne.s32.totalorder %s120, %s121
      %p133 = scmp.eq.s32.totalorder %s27, 2
      %p134 = por %p132, %p133
      %p136 = scmp.ne.s32.totalorder %s121, %s135
      %p137 = scmp.eq.s32.totalorder %s27, 0
      %p138 = por %p136, %p137
      %s140 = sadd.s32 %s139, 1
      %p143 = scmp.eq.s32.totalorder %s21, 2
      %p144 = scmp.ne.s32.totalorder %s139, %s141
      %p145 = scmp.eq.s32.totalorder %s21, 0
      %p146 = por %p144, %p145
      %p147 = scmp.ne.s32.totalorder %s139, %s141
      %p148 = scmp.eq.s32.totalorder %s26, 2
      %p149 = por %p147, %p148
      %p150 = scmp.ne.s32.totalorder %s141, %s142
      %p151 = scmp.eq.s32.totalorder %s26, 0
      %p152 = por %p150, %p151
      %p153 = scmp.ne.s32.totalorder %s141, %s142
      %p154 = scmp.eq.s32.totalorder %s27, 2
      %p155 = por %p153, %p154
      %p157 = scmp.ne.s32.totalorder %s142, %s156
      %p158 = scmp.eq.s32.totalorder %s27, 0
      %p159 = por %p157, %p158
      %s161 = sadd.s32 %s160, 1
      %p164 = scmp.eq.s32.totalorder %s21, 2
      %p165 = scmp.ne.s32.totalorder %s160, %s162
      %p166 = scmp.eq.s32.totalorder %s21, 0
      %p167 = por %p165, %p166
      %p168 = scmp.ne.s32.totalorder %s160, %s162
      %p169 = scmp.eq.s32.totalorder %s26, 2
      %p170 = por %p168, %p169
      %p171 = scmp.ne.s32.totalorder %s162, %s163
      %p172 = scmp.eq.s32.totalorder %s26, 0
      %p173 = por %p171, %p172
      %p174 = scmp.ne.s32.totalorder %s162, %s163
      %p175 = scmp.eq.s32.totalorder %s27, 2
      %p176 = por %p174, %p175
      %p178 = scmp.ne.s32.totalorder %s163, %s177
      %p179 = scmp.eq.s32.totalorder %s27, 0
      %p180 = por %p178, %p179
      %s181 = ssub.s32 %s21, %s28
      %p182 = scmp.eq.s32.totalorder %s181, 0
      %s184 = sadd.s32 %s183, 1
      %s185 = scalar_select %p182, %s183, %s184
      %p188 = pneg %p182
      %p189 = scmp.eq.s32.totalorder %s21, 2
      %p190 = por %p188, %p189
      %p191 = scmp.ne.s32.totalorder %s183, %s186
      %p192 = scmp.eq.s32.totalorder %s21, 0
      %p193 = por %p191, %p192
      %p194 = scmp.ne.s32.totalorder %s183, %s186
      %p195 = scmp.eq.s32.totalorder %s26, 2
      %p196 = por %p194, %p195
      %p197 = scmp.ne.s32.totalorder %s186, %s187
      %p198 = scmp.eq.s32.totalorder %s26, 0
      %p199 = por %p197, %p198
      %p200 = scmp.ne.s32.totalorder %s186, %s187
      %p201 = scmp.eq.s32.totalorder %s27, 2
      %p202 = por %p200, %p201
      %p204 = scmp.ne.s32.totalorder %s187, %s203
      %p205 = scmp.eq.s32.totalorder %s27, 0
      %p206 = por %p204, %p205
      %p207 = scmp.le.s32.totalorder 1, %s21
      %p208 = scmp.lt.s32.totalorder %s21, 4
      %p209 = pnand %p207, %p208
      %p210 = pneg %p209
      // Predicated region
      $region9: #{tpu_custom_call.1} parent=5 // pred_check
        _
      $region10: #{tpu_custom_call.1} parent=5 // pred_check_branch
        %212 = sbr.rel (%p209) target = $region12
      $region11: #{tpu_custom_call.1} parent=5 // pred_region
        %s213 = ssub.s32 %s21, 1
        // Predicated region
        $region13: #{tpu_custom_call.1} parent=11 // pred_check
          %p214 = pneg %p68
        $region14: #{tpu_custom_call.1} parent=11 // pred_check_branch
          %216 = sbr.rel (%p214) target = $region16
        $region15: #{tpu_custom_call.1} parent=11 // pred_region
          %s218 = ssub.s32 2048, 2048
          %219 = vsyncadd [#allocation6], %s218
          %s220 = sshll.u32 [#allocation5], 4
          %s221 = int_to_ptr.vmem [resolvable:$true] %s220
          %226 = dma.hbm_to_vmem [thread:$0]  %s1, 2048, %s221, [#allocation6], 128, 128, 8
        $region16: #{tpu_custom_call.1} parent=11 // pred_fallthru
          _
        // Predicated region
        $region17: #{tpu_custom_call.1} parent=11 // pred_check
          %p227 = pneg %p89
        $region18: #{tpu_custom_call.1} parent=11 // pred_check_branch
          %229 = sbr.rel (%p227) target = $region20
        $region19: #{tpu_custom_call.1} parent=11 // pred_region
          _
        $region20: #{tpu_custom_call.1} parent=11 // pred_fallthru
          _
        // Predicated region
        $region21: #{tpu_custom_call.1} parent=11 // pred_check
          %p230 = pneg %p110
        $region22: #{tpu_custom_call.1} parent=11 // pred_check_branch
          %232 = sbr.rel (%p230) target = $region24
        $region23: #{tpu_custom_call.1} parent=11 // pred_region
          %s234 = ssub.s32 4096, 4096
          %235 = vsyncadd [#allocation6], %s234
          %s236 = sshll.u32 [#allocation7], 4
          %s237 = int_to_ptr.vmem [resolvable:$true] %s236
          %242 = dma.hbm_to_vmem [thread:$0]  %s3, 4096, %s237, [#allocation6], 128, 128, 8
        $region24: #{tpu_custom_call.1} parent=11 // pred_fallthru
          _
        // Predicated region
        $region25: #{tpu_custom_call.1} parent=11 // pred_check
          %p243 = pneg %p131
        $region26: #{tpu_custom_call.1} parent=11 // pred_check_branch
          %245 = sbr.rel (%p243) target = $region28
        $region27: #{tpu_custom_call.1} parent=11 // pred_region
          _
        $region28: #{tpu_custom_call.1} parent=11 // pred_fallthru
          _
        // Predicated region
        $region29: #{tpu_custom_call.1} parent=11 // pred_check
          %p246 = pneg %p152
        $region30: #{tpu_custom_call.1} parent=11 // pred_check_branch
          %248 = sbr.rel (%p246) target = $region32
        $region31: #{tpu_custom_call.1} parent=11 // pred_region
          %s250 = ssub.s32 2048, 2048
          %251 = vsyncadd [#allocation9], %s250
          %s252 = sshll.u32 [#allocation8], 4
          %s253 = int_to_ptr.vmem [resolvable:$true] %s252
          %258 = dma.hbm_to_vmem [thread:$0]  %s5, 2048, %s253, [#allocation9], 64, 64, 4
        $region32: #{tpu_custom_call.1} parent=11 // pred_fallthru
          _
        // Predicated region
        $region33: #{tpu_custom_call.1} parent=11 // pred_check
          %p259 = pneg %p173
        $region34: #{tpu_custom_call.1} parent=11 // pred_check_branch
          %261 = sbr.rel (%p259) target = $region36
        $region35: #{tpu_custom_call.1} parent=11 // pred_region
          _
        $region36: #{tpu_custom_call.1} parent=11 // pred_fallthru
          _
      $region12: #{tpu_custom_call.1} parent=5 // pred_fallthru
        _
      %p262 = scmp.lt.s32.totalorder %s21, 3
      // Predicated region
      $region37: #{tpu_custom_call.1} parent=5 // pred_check
        %p263 = pneg %p262
      $region38: #{tpu_custom_call.1} parent=5 // pred_check_branch
        %265 = sbr.rel (%p263) target = $region40
      $region39: #{tpu_custom_call.1} parent=5 // pred_region
        // Predicated region
        $region41: #{tpu_custom_call.1} parent=39 // pred_check
          %p266 = pneg %p41
        $region42: #{tpu_custom_call.1} parent=39 // pred_check_branch
          %268 = sbr.rel (%p266) target = $region44
        $region43: #{tpu_custom_call.1} parent=39 // pred_region
          %s269 = sand.u32 %s31, 1
          %s270 = scalar_lea.sflag [#allocation3], %s269
          %s271 = sand.u32 %s31, 1
          %s272 = smul.addr %s271, 8
          %s273 = scalar_lea.vmem [#allocation2], %s272
          %s275 = ssub.s32 128, 128
          %276 = vsyncadd %s270, %s275
          %s277 = smul.addr %s21, 128
          %s278 = scalar_lea.hbm %s0, %s277
          %s280 = sshll.u32 %s273, 4
          %s281 = int_to_ptr.vmem [resolvable:$true] %s280
          %283 = dma.hbm_to_vmem [thread:$0]  %s278, 128, %s281, %s270
        $region44: #{tpu_custom_call.1} parent=39 // pred_fallthru
          _
      $region40: #{tpu_custom_call.1} parent=5 // pred_fallthru
        _
      %p284 = scmp.le.s32.totalorder 1, %s21
      %p285 = scmp.lt.s32.totalorder %s21, 4
      %p286 = pnand %p284, %p285
      %p287 = pneg %p286
      // Predicated region
      $region45: #{tpu_custom_call.1} parent=5 // pred_check
        _
      $region46: #{tpu_custom_call.1} parent=5 // pred_check_branch
        %289 = sbr.rel (%p286) target = $region48
      $region47: #{tpu_custom_call.1} parent=5 // pred_region
        %s290 = ssub.s32 %s21, 1
        %s291 = sand.u32 %s34, 1
        %s292 = scalar_lea.sflag [#allocation3], %s291
        %s293 = sand.u32 %s34, 1
        %s294 = smul.addr %s293, 8
        %s295 = scalar_lea.vmem [#allocation2], %s294
        // Predicated region
        $region49: #{tpu_custom_call.1} parent=47 // pred_check
          %p296 = pneg %p47
        $region50: #{tpu_custom_call.1} parent=47 // pred_check_branch
          %298 = sbr.rel (%p296) target = $region52
        $region51: #{tpu_custom_call.1} parent=47 // pred_region
          %299 = dma.done %s292, 128
        $region52: #{tpu_custom_call.1} parent=47 // pred_fallthru
          _
        // Predicated region
        $region53: #{tpu_custom_call.1} parent=47 // pred_check
          %p300 = pneg %p68
        $region54: #{tpu_custom_call.1} parent=47 // pred_check_branch
          %302 = sbr.rel (%p300) target = $region56
        $region55: #{tpu_custom_call.1} parent=47 // pred_region
          %303 = dma.done [#allocation6], 2048
        $region56: #{tpu_custom_call.1} parent=47 // pred_fallthru
          _
        // Predicated region
        $region57: #{tpu_custom_call.1} parent=47 // pred_check
          %p304 = pneg %p110
        $region58: #{tpu_custom_call.1} parent=47 // pred_check_branch
          %306 = sbr.rel (%p304) target = $region60
        $region59: #{tpu_custom_call.1} parent=47 // pred_region
          %307 = dma.done [#allocation6], 4096
        $region60: #{tpu_custom_call.1} parent=47 // pred_fallthru
          _
        // Predicated region
        $region61: #{tpu_custom_call.1} parent=47 // pred_check
          %p308 = pneg %p152
        $region62: #{tpu_custom_call.1} parent=47 // pred_check_branch
          %310 = sbr.rel (%p308) target = $region64
        $region63: #{tpu_custom_call.1} parent=47 // pred_region
          %311 = dma.done [#allocation9], 2048
        $region64: #{tpu_custom_call.1} parent=47 // pred_fallthru
          _
        %s312 = sand.u32 %s34, 1
        %s313 = scalar_lea.sflag [#allocation3], %s312
        %s314 = sand.u32 %s34, 1
        %s315 = smul.addr %s314, 8
        %s316 = scalar_lea.vmem [#allocation2], %s315
        %p317 = pneg %p47
        %p318 = pneg %p44
        %p319 = pneg %p68
        %p320 = pneg %p65
        %p321 = pneg %p89
        %p322 = pneg %p86
        %p323 = pneg %p110
        %p324 = pneg %p107
        %p325 = pneg %p131
        %p326 = pneg %p128
        %p327 = pneg %p152
        %p328 = pneg %p149
        %p329 = pneg %p173
        %p330 = pneg %p170
        %p331 = pneg %p199
        %p332 = pneg %p196
        %s333 = sand.u32 %s186, 1
        %s334 = scalar_lea.sflag [#allocation4], %s333
        %s335 = sand.u32 %s186, 1
        %s336 = smul.addr %s335, 8
        %s337 = scalar_lea.vmem [#allocation10], %s336
        %v339 = vld [vmem:[%s295] sm:$0xff]
        %v340 = vpack.c.bf16 %v339, %v339
        %v341 = vld [vmem:[#allocation5] sm:$0xff]
        %v342 = vld [vmem:[#allocation5 + $0x8] sm:$0xff]
        %v343 = vld [vmem:[#allocation5 + $0x10] sm:$0xff]
        %v344 = vld [vmem:[#allocation5 + $0x18] sm:$0xff]
        %v345 = vld [vmem:[#allocation5 + $0x20] sm:$0xff]
        %v346 = vld [vmem:[#allocation5 + $0x28] sm:$0xff]
        %v347 = vld [vmem:[#allocation5 + $0x30] sm:$0xff]
        %v348 = vld [vmem:[#allocation5 + $0x38] sm:$0xff]
        %v349 = vld [vmem:[#allocation5 + $0x40] sm:$0xff]
        %v350 = vld [vmem:[#allocation5 + $0x48] sm:$0xff]
        %v351 = vld [vmem:[#allocation5 + $0x50] sm:$0xff]
        %v352 = vld [vmem:[#allocation5 + $0x58] sm:$0xff]
        %v353 = vld [vmem:[#allocation5 + $0x60] sm:$0xff]
        %v354 = vld [vmem:[#allocation5 + $0x68] sm:$0xff]
        %v355 = vld [vmem:[#allocation5 + $0x70] sm:$0xff]
        %v356 = vld [vmem:[#allocation5 + $0x78] sm:$0xff]
        %v357 = vld [vmem:[%s2] sm:$0x3]
        %v359 = vlaneseq
        %v360 = vshrl.u32 %v359, 7
        %v361 = vsub.s32 0, %v360
        %v362 = vrot.slane %v357, %v361
        %v363 = vlaneseq
        %v364 = vshrl.u32 %v363, 7
        %v365 = vsub.s32 1, %v364
        %v366 = vrot.slane %v357, %v365
        %v385 = vunpack.c.l.b16 %v341
        %v386 = vunpack.c.h.b16 %v341
        %v387 = vunpack.c.l.b16 %v342
        %v388 = vunpack.c.h.b16 %v342
        %v389 = vunpack.c.l.b16 %v343
        %v390 = vunpack.c.h.b16 %v343
        %v391 = vunpack.c.l.b16 %v344
        %v392 = vunpack.c.h.b16 %v344
        %v393 = vunpack.c.l.b16 %v345
        %v394 = vunpack.c.h.b16 %v345
        %v395 = vunpack.c.l.b16 %v346
        %v396 = vunpack.c.h.b16 %v346
        %v397 = vunpack.c.l.b16 %v347
        %v398 = vunpack.c.h.b16 %v347
        %v399 = vunpack.c.l.b16 %v348
        %v400 = vunpack.c.h.b16 %v348
        %v401 = vunpack.c.l.b16 %v349
        %v402 = vunpack.c.h.b16 %v349
        %v403 = vunpack.c.l.b16 %v350
        %v404 = vunpack.c.h.b16 %v350
        %v405 = vunpack.c.l.b16 %v351
        %v406 = vunpack.c.h.b16 %v351
        %v407 = vunpack.c.l.b16 %v352
        %v408 = vunpack.c.h.b16 %v352
        %v409 = vunpack.c.l.b16 %v353
        %v410 = vunpack.c.h.b16 %v353
        %v411 = vunpack.c.l.b16 %v354
        %v412 = vunpack.c.h.b16 %v354
        %v413 = vunpack.c.l.b16 %v355
        %v414 = vunpack.c.h.b16 %v355
        %v415 = vunpack.c.l.b16 %v356
        %v416 = vunpack.c.h.b16 %v356
        %v417 = vpack.c.b16 %v387, %v385
        %v418 = vpack.c.b16 %v388, %v386
        %v419 = vpack.c.b16 %v391, %v389
        %v420 = vpack.c.b16 %v392, %v390
        %v421 = vpack.c.b16 %v395, %v393
        %v422 = vpack.c.b16 %v396, %v394
        %v423 = vpack.c.b16 %v399, %v397
        %v424 = vpack.c.b16 %v400, %v398
        %v425 = vpack.c.b16 %v403, %v401
        %v426 = vpack.c.b16 %v404, %v402
        %v427 = vpack.c.b16 %v407, %v405
        %v428 = vpack.c.b16 %v408, %v406
        %v429 = vpack.c.b16 %v411, %v409
        %v430 = vpack.c.b16 %v412, %v410
        %v431 = vpack.c.b16 %v415, %v413
        %v432 = vpack.c.b16 %v416, %v414
        %449 = vmatprep.subr.bf16.mxu0 %v418
        %450 = vmatpush1.bf16.msra.mxu0 %v417
        %451 = vmatprep.subr.bf16.mxu0 %v420
        %452 = vmatpush1.bf16.msra.mxu0 %v419
        %453 = vmatprep.subr.bf16.mxu0 %v422
        %454 = vmatpush1.bf16.msra.mxu0 %v421
        %455 = vmatprep.subr.bf16.mxu0 %v424
        %456 = vmatpush1.bf16.msra.mxu0 %v423
        %457 = vmatprep.subr.bf16.mxu0 %v426
        %458 = vmatpush1.bf16.msra.mxu0 %v425
        %459 = vmatprep.subr.bf16.mxu0 %v428
        %460 = vmatpush1.bf16.msra.mxu0 %v427
        %461 = vmatprep.subr.bf16.mxu0 %v430
        %462 = vmatpush1.bf16.msra.mxu0 %v429
        %463 = vmatprep.subr.bf16.mxu0 %v432
        %464 = vmatpush1.bf16.msra.mxu0 %v431
        %465 = vmatprep.subr.bf16.mxu0 0
        %466 = vmatpush1.bf16.msra.mxu0 0
        %467 = vmatprep.subr.bf16.mxu0 0
        %468 = vmatpush1.bf16.msra.mxu0 0
        %469 = vmatprep.subr.bf16.mxu0 0
        %470 = vmatpush1.bf16.msra.mxu0 0
        %471 = vmatprep.subr.bf16.mxu0 0
        %472 = vmatpush1.bf16.msra.mxu0 0
        %473 = vmatprep.subr.bf16.mxu0 0
        %474 = vmatpush1.bf16.msra.mxu0 0
        %475 = vmatprep.subr.bf16.mxu0 0
        %476 = vmatpush1.bf16.msra.mxu0 0
        %477 = vmatprep.subr.bf16.mxu0 0
        %478 = vmatpush1.bf16.msra.mxu0 0
        %479 = vmatprep.subr.bf16.mxu0 0
        %480 = vmatpush1.bf16.msra.mxu0 0
        %481 = vmatprep.mubr.bf16.mxu0 0
        %482 = vmatmul.mubr.bf16.gmra.mrb[0].mxu0 %v340
        %v483 = vpop.f32.mrb[0].mxu0
        %v484 = vadd.f32 %v362, %v483
        %v485 = vpop.f32.mrb[0].mxu0
        %v486 = vadd.f32 %v366, %v485
        %v487 = vpop.f32.mrb[0].mxu0
        %v488 = vpop.f32.mrb[0].mxu0
        %489 = vdwg.mxu0
        %v490 = vmax.f32 %v484, 0.0
        %v491 = vmax.f32 %v486, 0.0
        %v492 = vpack.c.bf16 %v490, %v490
        %v493 = vpack.c.bf16 %v491, %v491
        %v494 = vld [vmem:[#allocation7] sm:$0xff]
        %v495 = vld [vmem:[#allocation7 + $0x8] sm:$0xff]
        %v496 = vld [vmem:[#allocation7 + $0x10] sm:$0xff]
        %v497 = vld [vmem:[#allocation7 + $0x18] sm:$0xff]
        %v498 = vld [vmem:[#allocation7 + $0x20] sm:$0xff]
        %v499 = vld [vmem:[#allocation7 + $0x28] sm:$0xff]
        %v500 = vld [vmem:[#allocation7 + $0x30] sm:$0xff]
        %v501 = vld [vmem:[#allocation7 + $0x38] sm:$0xff]
        %v502 = vld [vmem:[#allocation7 + $0x40] sm:$0xff]
        %v503 = vld [vmem:[#allocation7 + $0x48] sm:$0xff]
        %v504 = vld [vmem:[#allocation7 + $0x50] sm:$0xff]
        %v505 = vld [vmem:[#allocation7 + $0x58] sm:$0xff]
        %v506 = vld [vmem:[#allocation7 + $0x60] sm:$0xff]
        %v507 = vld [vmem:[#allocation7 + $0x68] sm:$0xff]
        %v508 = vld [vmem:[#allocation7 + $0x70] sm:$0xff]
        %v509 = vld [vmem:[#allocation7 + $0x78] sm:$0xff]
        %v510 = vld [vmem:[#allocation7 + $0x80] sm:$0xff]
        %v511 = vld [vmem:[#allocation7 + $0x88] sm:$0xff]
        %v512 = vld [vmem:[#allocation7 + $0x90] sm:$0xff]
        %v513 = vld [vmem:[#allocation7 + $0x98] sm:$0xff]
        %v514 = vld [vmem:[#allocation7 + $0xa0] sm:$0xff]
        %v515 = vld [vmem:[#allocation7 + $0xa8] sm:$0xff]
        %v516 = vld [vmem:[#allocation7 + $0xb0] sm:$0xff]
        %v517 = vld [vmem:[#allocation7 + $0xb8] sm:$0xff]
        %v518 = vld [vmem:[#allocation7 + $0xc0] sm:$0xff]
        %v519 = vld [vmem:[#allocation7 + $0xc8] sm:$0xff]
        %v520 = vld [vmem:[#allocation7 + $0xd0] sm:$0xff]
        %v521 = vld [vmem:[#allocation7 + $0xd8] sm:$0xff]
        %v522 = vld [vmem:[#allocation7 + $0xe0] sm:$0xff]
        %v523 = vld [vmem:[#allocation7 + $0xe8] sm:$0xff]
        %v524 = vld [vmem:[#allocation7 + $0xf0] sm:$0xff]
        %v525 = vld [vmem:[#allocation7 + $0xf8] sm:$0xff]
        %v526 = vld [vmem:[%s4] sm:$0x3]
        %v528 = vlaneseq
        %v529 = vshrl.u32 %v528, 7
        %v530 = vsub.s32 0, %v529
        %v531 = vrot.slane %v526, %v530
        %v532 = vlaneseq
        %v533 = vshrl.u32 %v532, 7
        %v534 = vsub.s32 1, %v533
        %v535 = vrot.slane %v526, %v534
        %v570 = vunpack.c.l.b16 %v494
        %v571 = vunpack.c.h.b16 %v494
        %v572 = vunpack.c.l.b16 %v495
        %v573 = vunpack.c.h.b16 %v495
        %v574 = vunpack.c.l.b16 %v496
        %v575 = vunpack.c.h.b16 %v496
        %v576 = vunpack.c.l.b16 %v497
        %v577 = vunpack.c.h.b16 %v497
        %v578 = vunpack.c.l.b16 %v498
        %v579 = vunpack.c.h.b16 %v498
        %v580 = vunpack.c.l.b16 %v499
        %v581 = vunpack.c.h.b16 %v499
        %v582 = vunpack.c.l.b16 %v500
        %v583 = vunpack.c.h.b16 %v500
        %v584 = vunpack.c.l.b16 %v501
        %v585 = vunpack.c.h.b16 %v501
        %v586 = vunpack.c.l.b16 %v502
        %v587 = vunpack.c.h.b16 %v502
        %v588 = vunpack.c.l.b16 %v503
        %v589 = vunpack.c.h.b16 %v503
        %v590 = vunpack.c.l.b16 %v504
        %v591 = vunpack.c.h.b16 %v504
        %v592 = vunpack.c.l.b16 %v505
        %v593 = vunpack.c.h.b16 %v505
        %v594 = vunpack.c.l.b16 %v506
        %v595 = vunpack.c.h.b16 %v506
        %v596 = vunpack.c.l.b16 %v507
        %v597 = vunpack.c.h.b16 %v507
        %v598 = vunpack.c.l.b16 %v508
        %v599 = vunpack.c.h.b16 %v508
        %v600 = vunpack.c.l.b16 %v509
        %v601 = vunpack.c.h.b16 %v509
        %v602 = vunpack.c.l.b16 %v510
        %v603 = vunpack.c.h.b16 %v510
        %v604 = vunpack.c.l.b16 %v511
        %v605 = vunpack.c.h.b16 %v511
        %v606 = vunpack.c.l.b16 %v512
        %v607 = vunpack.c.h.b16 %v512
        %v608 = vunpack.c.l.b16 %v513
        %v609 = vunpack.c.h.b16 %v513
        %v610 = vunpack.c.l.b16 %v514
        %v611 = vunpack.c.h.b16 %v514
        %v612 = vunpack.c.l.b16 %v515
        %v613 = vunpack.c.h.b16 %v515
        %v614 = vunpack.c.l.b16 %v516
        %v615 = vunpack.c.h.b16 %v516
        %v616 = vunpack.c.l.b16 %v517
        %v617 = vunpack.c.h.b16 %v517
        %v618 = vunpack.c.l.b16 %v518
        %v619 = vunpack.c.h.b16 %v518
        %v620 = vunpack.c.l.b16 %v519
        %v621 = vunpack.c.h.b16 %v519
        %v622 = vunpack.c.l.b16 %v520
        %v623 = vunpack.c.h.b16 %v520
        %v624 = vunpack.c.l.b16 %v521
        %v625 = vunpack.c.h.b16 %v521
        %v626 = vunpack.c.l.b16 %v522
        %v627 = vunpack.c.h.b16 %v522
        %v628 = vunpack.c.l.b16 %v523
        %v629 = vunpack.c.h.b16 %v523
        %v630 = vunpack.c.l.b16 %v524
        %v631 = vunpack.c.h.b16 %v524
        %v632 = vunpack.c.l.b16 %v525
        %v633 = vunpack.c.h.b16 %v525
        %v634 = vpack.c.b16 %v572, %v570
        %v635 = vpack.c.b16 %v573, %v571
        %v636 = vpack.c.b16 %v576, %v574
        %v637 = vpack.c.b16 %v577, %v575
        %v638 = vpack.c.b16 %v580, %v578
        %v639 = vpack.c.b16 %v581, %v579
        %v640 = vpack.c.b16 %v584, %v582
        %v641 = vpack.c.b16 %v585, %v583
        %v642 = vpack.c.b16 %v588, %v586
        %v643 = vpack.c.b16 %v589, %v587
        %v644 = vpack.c.b16 %v592, %v590
        %v645 = vpack.c.b16 %v593, %v591
        %v646 = vpack.c.b16 %v596, %v594
        %v647 = vpack.c.b16 %v597, %v595
        %v648 = vpack.c.b16 %v600, %v598
        %v649 = vpack.c.b16 %v601, %v599
        %v650 = vpack.c.b16 %v604, %v602
        %v651 = vpack.c.b16 %v605, %v603
        %v652 = vpack.c.b16 %v608, %v606
        %v653 = vpack.c.b16 %v609, %v607
        %v654 = vpack.c.b16 %v612, %v610
        %v655 = vpack.c.b16 %v613, %v611
        %v656 = vpack.c.b16 %v616, %v614
        %v657 = vpack.c.b16 %v617, %v615
        %v658 = vpack.c.b16 %v620, %v618
        %v659 = vpack.c.b16 %v621, %v619
        %v660 = vpack.c.b16 %v624, %v622
        %v661 = vpack.c.b16 %v625, %v623
        %v662 = vpack.c.b16 %v628, %v626
        %v663 = vpack.c.b16 %v629, %v627
        %v664 = vpack.c.b16 %v632, %v630
        %v665 = vpack.c.b16 %v633, %v631
        %698 = vmatprep.subr.bf16.mxu0 %v635
        %699 = vmatpush1.bf16.msra.mxu0 %v634
        %700 = vmatprep.subr.bf16.mxu0 %v637
        %701 = vmatpush1.bf16.msra.mxu0 %v636
        %702 = vmatprep.subr.bf16.mxu0 %v639
        %703 = vmatpush1.bf16.msra.mxu0 %v638
        %704 = vmatprep.subr.bf16.mxu0 %v641
        %705 = vmatpush1.bf16.msra.mxu0 %v640
        %706 = vmatprep.subr.bf16.mxu0 %v643
        %707 = vmatpush1.bf16.msra.mxu0 %v642
        %708 = vmatprep.subr.bf16.mxu0 %v645
        %709 = vmatpush1.bf16.msra.mxu0 %v644
        %710 = vmatprep.subr.bf16.mxu0 %v647
        %711 = vmatpush1.bf16.msra.mxu0 %v646
        %712 = vmatprep.subr.bf16.mxu0 %v649
        %713 = vmatpush1.bf16.msra.mxu0 %v648
        %714 = vmatprep.subr.bf16.mxu0 %v651
        %715 = vmatpush1.bf16.msra.mxu0 %v650
        %716 = vmatprep.subr.bf16.mxu0 %v653
        %717 = vmatpush1.bf16.msra.mxu0 %v652
        %718 = vmatprep.subr.bf16.mxu0 %v655
        %719 = vmatpush1.bf16.msra.mxu0 %v654
        %720 = vmatprep.subr.bf16.mxu0 %v657
        %721 = vmatpush1.bf16.msra.mxu0 %v656
        %722 = vmatprep.subr.bf16.mxu0 %v659
        %723 = vmatpush1.bf16.msra.mxu0 %v658
        %724 = vmatprep.subr.bf16.mxu0 %v661
        %725 = vmatpush1.bf16.msra.mxu0 %v660
        %726 = vmatprep.subr.bf16.mxu0 %v663
        %727 = vmatpush1.bf16.msra.mxu0 %v662
        %728 = vmatprep.subr.bf16.mxu0 %v665
        %729 = vmatpush1.bf16.msra.mxu0 %v664
        %730 = vmatprep.mubr.bf16.mxu0 %v493
        %731 = vmatmul.mubr.bf16.gmra.mrb[0].mxu0 %v492
        %v732 = vpop.f32.mrb[0].mxu0
        %v733 = vadd.f32 %v531, %v732
        %v734 = vpop.f32.mrb[0].mxu0
        %v735 = vadd.f32 %v535, %v734
        %v736 = vpop.f32.mrb[0].mxu0
        %v737 = vpop.f32.mrb[0].mxu0
        %738 = vdwg.mxu0
        %v739 = vmax.f32 %v733, 0.0
        %v740 = vmax.f32 %v735, 0.0
        %v741 = vpack.c.bf16 %v739, %v739
        %v742 = vpack.c.bf16 %v740, %v740
        %v743 = vld [vmem:[#allocation8] sm:$0xf]
        %v744 = vld [vmem:[#allocation8 + $0x4] sm:$0xf]
        %v745 = vld [vmem:[#allocation8 + $0x8] sm:$0xf]
        %v746 = vld [vmem:[#allocation8 + $0xc] sm:$0xf]
        %v747 = vld [vmem:[#allocation8 + $0x10] sm:$0xf]
        %v748 = vld [vmem:[#allocation8 + $0x14] sm:$0xf]
        %v749 = vld [vmem:[#allocation8 + $0x18] sm:$0xf]
        %v750 = vld [vmem:[#allocation8 + $0x1c] sm:$0xf]
        %v751 = vld [vmem:[#allocation8 + $0x20] sm:$0xf]
        %v752 = vld [vmem:[#allocation8 + $0x24] sm:$0xf]
        %v753 = vld [vmem:[#allocation8 + $0x28] sm:$0xf]
        %v754 = vld [vmem:[#allocation8 + $0x2c] sm:$0xf]
        %v755 = vld [vmem:[#allocation8 + $0x30] sm:$0xf]
        %v756 = vld [vmem:[#allocation8 + $0x34] sm:$0xf]
        %v757 = vld [vmem:[#allocation8 + $0x38] sm:$0xf]
        %v758 = vld [vmem:[#allocation8 + $0x3c] sm:$0xf]
        %v759 = vld [vmem:[#allocation8 + $0x40] sm:$0xf]
        %v760 = vld [vmem:[#allocation8 + $0x44] sm:$0xf]
        %v761 = vld [vmem:[#allocation8 + $0x48] sm:$0xf]
        %v762 = vld [vmem:[#allocation8 + $0x4c] sm:$0xf]
        %v763 = vld [vmem:[#allocation8 + $0x50] sm:$0xf]
        %v764 = vld [vmem:[#allocation8 + $0x54] sm:$0xf]
        %v765 = vld [vmem:[#allocation8 + $0x58] sm:$0xf]
        %v766 = vld [vmem:[#allocation8 + $0x5c] sm:$0xf]
        %v767 = vld [vmem:[#allocation8 + $0x60] sm:$0xf]
        %v768 = vld [vmem:[#allocation8 + $0x64] sm:$0xf]
        %v769 = vld [vmem:[#allocation8 + $0x68] sm:$0xf]
        %v770 = vld [vmem:[#allocation8 + $0x6c] sm:$0xf]
        %v771 = vld [vmem:[#allocation8 + $0x70] sm:$0xf]
        %v772 = vld [vmem:[#allocation8 + $0x74] sm:$0xf]
        %v773 = vld [vmem:[#allocation8 + $0x78] sm:$0xf]
        %v774 = vld [vmem:[#allocation8 + $0x7c] sm:$0xf]
        %v775 = vld [vmem:[%s6] sm:$0x1]
        %v777 = vlaneseq
        %v778 = vshrl.u32 %v777, 7
        %v779 = vsub.s32 0, %v778
        %v780 = vrot.slane %v775, %v779
        %v814 = vunpack.c.l.b16 %v743
        %v815 = vunpack.c.l.b16 %v744
        %v816 = vunpack.c.l.b16 %v745
        %v817 = vunpack.c.l.b16 %v746
        %v818 = vunpack.c.l.b16 %v747
        %v819 = vunpack.c.l.b16 %v748
        %v820 = vunpack.c.l.b16 %v749
        %v821 = vunpack.c.l.b16 %v750
        %v822 = vunpack.c.l.b16 %v751
        %v823 = vunpack.c.l.b16 %v752
        %v824 = vunpack.c.l.b16 %v753
        %v825 = vunpack.c.l.b16 %v754
        %v826 = vunpack.c.l.b16 %v755
        %v827 = vunpack.c.l.b16 %v756
        %v828 = vunpack.c.l.b16 %v757
        %v829 = vunpack.c.l.b16 %v758
        %v830 = vunpack.c.l.b16 %v759
        %v831 = vunpack.c.l.b16 %v760
        %v832 = vunpack.c.l.b16 %v761
        %v833 = vunpack.c.l.b16 %v762
        %v834 = vunpack.c.l.b16 %v763
        %v835 = vunpack.c.l.b16 %v764
        %v836 = vunpack.c.l.b16 %v765
        %v837 = vunpack.c.l.b16 %v766
        %v838 = vunpack.c.l.b16 %v767
        %v839 = vunpack.c.l.b16 %v768
        %v840 = vunpack.c.l.b16 %v769
        %v841 = vunpack.c.l.b16 %v770
        %v842 = vunpack.c.l.b16 %v771
        %v843 = vunpack.c.l.b16 %v772
        %v844 = vunpack.c.l.b16 %v773
        %v845 = vunpack.c.l.b16 %v774
        %v846 = vpack.c.b16 %v815, %v814
        %v847 = vpack.c.b16 %v817, %v816
        %v848 = vpack.c.b16 %v819, %v818
        %v849 = vpack.c.b16 %v821, %v820
        %v850 = vpack.c.b16 %v823, %v822
        %v851 = vpack.c.b16 %v825, %v824
        %v852 = vpack.c.b16 %v827, %v826
        %v853 = vpack.c.b16 %v829, %v828
        %v854 = vpack.c.b16 %v831, %v830
        %v855 = vpack.c.b16 %v833, %v832
        %v856 = vpack.c.b16 %v835, %v834
        %v857 = vpack.c.b16 %v837, %v836
        %v858 = vpack.c.b16 %v839, %v838
        %v859 = vpack.c.b16 %v841, %v840
        %v860 = vpack.c.b16 %v843, %v842
        %v861 = vpack.c.b16 %v845, %v844
        %878 = vmatprep.subr.bf16.mxu0 0
        %879 = vmatpush1.bf16.msra.mxu0 %v846
        %880 = vmatprep.subr.bf16.mxu0 0
        %881 = vmatpush1.bf16.msra.mxu0 %v847
        %882 = vmatprep.subr.bf16.mxu0 0
        %883 = vmatpush1.bf16.msra.mxu0 %v848
        %884 = vmatprep.subr.bf16.mxu0 0
        %885 = vmatpush1.bf16.msra.mxu0 %v849
        %886 = vmatprep.subr.bf16.mxu0 0
        %887 = vmatpush1.bf16.msra.mxu0 %v850
        %888 = vmatprep.subr.bf16.mxu0 0
        %889 = vmatpush1.bf16.msra.mxu0 %v851
        %890 = vmatprep.subr.bf16.mxu0 0
        %891 = vmatpush1.bf16.msra.mxu0 %v852
        %892 = vmatprep.subr.bf16.mxu0 0
        %893 = vmatpush1.bf16.msra.mxu0 %v853
        %894 = vmatprep.subr.bf16.mxu0 0
        %895 = vmatpush1.bf16.msra.mxu0 %v854
        %896 = vmatprep.subr.bf16.mxu0 0
        %897 = vmatpush1.bf16.msra.mxu0 %v855
        %898 = vmatprep.subr.bf16.mxu0 0
        %899 = vmatpush1.bf16.msra.mxu0 %v856
        %900 = vmatprep.subr.bf16.mxu0 0
        %901 = vmatpush1.bf16.msra.mxu0 %v857
        %902 = vmatprep.subr.bf16.mxu0 0
        %903 = vmatpush1.bf16.msra.mxu0 %v858
        %904 = vmatprep.subr.bf16.mxu0 0
        %905 = vmatpush1.bf16.msra.mxu0 %v859
        %906 = vmatprep.subr.bf16.mxu0 0
        %907 = vmatpush1.bf16.msra.mxu0 %v860
        %908 = vmatprep.subr.bf16.mxu0 0
        %909 = vmatpush1.bf16.msra.mxu0 %v861
        %910 = vmatprep.mubr.bf16.mxu0 %v742
        %911 = vmatmul.mubr.bf16.gmra.mrb[0].mxu0 %v741
        %v912 = vpop.f32.mrb[0].mxu0
        %v913 = vadd.f32 %v780, %v912
        %v914 = vpop.f32.mrb[0].mxu0
        %v915 = vpop.f32.mrb[0].mxu0
        %v916 = vpop.f32.mrb[0].mxu0
        %917 = vdwg.mxu0
        %v918 = vtanh.pop %v913
        %v919 = vmul.f32 %v918, 2.0
        %920 = vst [vmem:[%s337] sm:$0xff] %v919
        %s921 = sand.u32 %s186, 1
        %s922 = scalar_lea.sflag [#allocation4], %s921
        %s923 = sand.u32 %s186, 1
        %s924 = smul.addr %s923, 8
        %s925 = scalar_lea.vmem [#allocation10], %s924
        // Predicated region
        $region65: #{tpu_custom_call.1} parent=47 // pred_check
          %p926 = pneg %p196
        $region66: #{tpu_custom_call.1} parent=47 // pred_check_branch
          %928 = sbr.rel (%p926) target = $region68
        $region67: #{tpu_custom_call.1} parent=47 // pred_region
          %s930 = ssub.s32 128, 128
          %931 = vsyncadd %s922, %s930
          %s932 = smul.addr %s26, 128
          %s933 = scalar_lea.hbm %s7, %s932
          %s935 = sshll.u32 %s925, 4
          %s936 = int_to_ptr.vmem [resolvable:$true] %s935
          %938 = dma.vmem_to_hbm [thread:$0]  %s936, 128, %s933, %s922
        $region68: #{tpu_custom_call.1} parent=47 // pred_fallthru
          _
      $region48: #{tpu_custom_call.1} parent=5 // pred_fallthru
        _
      %p939 = scmp.le.s32.totalorder 2, %s21
      // Predicated region
      $region69: #{tpu_custom_call.1} parent=5 // pred_check
        %p940 = pneg %p939
      $region70: #{tpu_custom_call.1} parent=5 // pred_check_branch
        %942 = sbr.rel (%p940) target = $region72
      $region71: #{tpu_custom_call.1} parent=5 // pred_region
        %s943 = ssub.s32 %s21, 2
        // Predicated region
        $region73: #{tpu_custom_call.1} parent=71 // pred_check
          %p944 = pneg %p202
        $region74: #{tpu_custom_call.1} parent=71 // pred_check_branch
          %946 = sbr.rel (%p944) target = $region76
        $region75: #{tpu_custom_call.1} parent=71 // pred_region
          %s947 = sand.u32 %s187, 1
          %s948 = scalar_lea.sflag [#allocation4], %s947
          %s949 = sand.u32 %s187, 1
          %s950 = smul.addr %s949, 8
          %s951 = scalar_lea.vmem [#allocation10], %s950
          %952 = dma.done %s948, 128
        $region76: #{tpu_custom_call.1} parent=71 // pred_fallthru
          _
      $region72: #{tpu_custom_call.1} parent=5 // pred_fallthru
        _
    $region6: #{tpu_custom_call.1} parent=1 // loop_footer
      %s25 = sadd.s32 1, %s21
    $region7: #{tpu_custom_call.1} parent=1 // loop_footer_branch
      %20 = sbr.rel target = $region3
    $region8: #{tpu_custom_call.1} parent=1 // loop_exit
      _
    %953 = vsyncpa [#allocation3], 1
    %s954 = scalar_lea.sflag [#allocation3], 1
    %955 = vsyncpa %s954, 1
    %956 = vsyncpa [#allocation6], 1
    %957 = vsyncpa [#allocation9], 1
    %958 = vsyncpa [#allocation4], 1
    %s959 = scalar_lea.sflag [#allocation4], 1
    %960 = vsyncpa %s959, 1

</llo_original>
